<compile_context>
chip_gen: v7x
topology: tpu7x:2x2x1
jax: 0.10.0
libtpu: 0.0.40
codegen_flags: <defaults>
</compile_context>

<pallas_src>
import functools

import jax
import jax.numpy as jnp
from jax.experimental import pallas as pl
from jax.experimental.pallas import tpu as pltpu


def _round_up(x, m):
    return (x + m - 1) // m * m


# --------------------------------------------------------------------------- #
# Kernel
# --------------------------------------------------------------------------- #
def a3c_kernel(state_ref, w1_ref, b1_ref, wh_ref, bh_ref, out_ref):
    # Shared layer: bf16 MXU matmul, f32 accumulate, f32 bias + ReLU (VPU).
    x = jnp.dot(state_ref[...], w1_ref[...],
                preferred_element_type=jnp.float32)
    x = jnp.maximum(x + b1_ref[...], 0.0)
    # Fused policy+value head kept in f32 (value-head precision): one lane-dense
    # [TILE_B, 128] matmul + a single unmasked bf16 store.
    h = jnp.dot(x, wh_ref[...], preferred_element_type=jnp.float32)
    out_ref[...] = (h + bh_ref[...]).astype(out_ref.dtype)


# --------------------------------------------------------------------------- #
# One-time parameter packing (hoisted out of the per-call forward)
# --------------------------------------------------------------------------- #
def prepare_params(w1, b1, wp, bp, wv, bv):
    """Fuse the policy/value heads, pad the head lane axis up to a multiple of
    128 and cast the shared-layer weight to bf16.  Call once; reuse for every
    forward (weights are [in_dim, out_dim], i.e. transposed vs. torch)."""
    H = w1.shape[1]
    A = wp.shape[1]
    head_n = _round_up(A + 1, 128)

    w_heads = jnp.concatenate([wp, wv], axis=1).astype(jnp.float32)       # [H, A+1]
    b_heads = jnp.concatenate(
        [bp.reshape(1, -1), bv.reshape(1, -1)], axis=1).astype(jnp.float32)
    pad_n = head_n - (A + 1)
    if pad_n:
        w_heads = jnp.pad(w_heads, ((0, 0), (0, pad_n)))
        b_heads = jnp.pad(b_heads, ((0, 0), (0, pad_n)))

    packed = {
        "w1": w1.astype(jnp.bfloat16),               # [S, H]      bf16 (MXU native)
        "b1": b1.reshape(1, H).astype(jnp.float32),  # [1, H]      f32
        "w_heads": w_heads,                          # [H, head_n] f32 (head precision)
        "b_heads": b_heads,                          # [1, head_n] f32
    }
    return jax.tree_util.tree_map(jnp.asarray, packed), A


def _choose_tile_b(batch, tile_b):
    n16 = -(-batch // 16)                    # sublane groups (bf16 packs 16 rows)
    tile_b = max(16, _round_up(tile_b, 16))
    tile_b = min(tile_b, n16 * 16)           # never larger than the padded batch
    if n16 >= 2:                             # v7x: keep >= 2 "parallel" grid steps
        tile_b = min(tile_b, -(-n16 // 2) * 16)
    return tile_b


# --------------------------------------------------------------------------- #
# Forward
# --------------------------------------------------------------------------- #
@functools.partial(jax.jit,
                   static_argnames=("action_dim", "tile_b", "min_pallas_batch"))
def a3c_forward(state, w1, b1, w_heads, b_heads, *, action_dim,
                tile_b=512, min_pallas_batch=128):
    """state: [B, S].  Packed params from prepare_params().
    Returns (logits [B, A] f32, value [B, 1] f32)."""
    B, S = state.shape
    H = w1.shape[1]
    head_n = w_heads.shape[1]
    A = action_dim

    # ---- Tiny-batch short-circuit: pallas fixed overhead would dominate. ----
    if B < min_pallas_batch:
        x = jnp.dot(state.astype(jnp.bfloat16), w1,
                    preferred_element_type=jnp.float32) + b1
        x = jnp.maximum(x, 0.0)
        out = (jnp.dot(x, w_heads[:, :A + 1],
                       preferred_element_type=jnp.float32)
               + b_heads[:, :A + 1]).astype(jnp.bfloat16).astype(jnp.float32)
        return out[:, :A], out[:, A:A + 1]

    # ---- Pallas path. ----
    tb = _choose_tile_b(B, tile_b)
    b_pad = _round_up(B, tb)
    state_c = state.astype(jnp.bfloat16)
    if b_pad != B:
        state_c = jnp.pad(state_c, ((0, b_pad - B), (0, 0)))

    grid = (b_pad // tb,)
    const = lambda i: (0, 0)

    flops = 2 * b_pad * (S * H + H * head_n)
    bytes_accessed = (b_pad * S * 2 + S * H * 2 + H * 4
                      + H * head_n * 4 + head_n * 4 + b_pad * head_n * 2)

    out = pl.pallas_call(
        a3c_kernel,
        grid=grid,
        in_specs=[
            pl.BlockSpec((tb, S), lambda i: (i, 0)),   # state tile: pipelined
            pl.BlockSpec((S, H), const),               # weights: VMEM-resident
            pl.BlockSpec((1, H), const),
            pl.BlockSpec((H, head_n), const),
            pl.BlockSpec((1, head_n), const),
        ],
        out_specs=pl.BlockSpec((tb, head_n), lambda i: (i, 0)),
        out_shape=jax.ShapeDtypeStruct((b_pad, head_n), jnp.bfloat16),
        compiler_params=pltpu.CompilerParams(
            dimension_semantics=("parallel",)),
        cost_estimate=pl.CostEstimate(
            flops=flops, transcendentals=0, bytes_accessed=bytes_accessed),
    )(state_c, w1, b1, w_heads, b_heads)

    out = out[:B].astype(jnp.float32)
    return out[:, :A], out[:, A:A + 1]


# --------------------------------------------------------------------------- #
# Parameter init (PyTorch-Linear-shaped params, stored transposed [in, out])
# --------------------------------------------------------------------------- #
def init_params(key, state_dim, action_dim, hidden=128):
    ks = jax.random.split(key, 6)
    w1 = jax.random.normal(ks[0], (state_dim, hidden), jnp.float32) * 0.1
    b1 = jax.random.normal(ks[1], (1, hidden), jnp.float32) * 0.1
    wp = jax.random.normal(ks[2], (hidden, action_dim), jnp.float32) * 0.1
    bp = jax.random.normal(ks[3], (1, action_dim), jnp.float32) * 0.1
    wv = jax.random.normal(ks[4], (hidden, 1), jnp.float32) * 0.1
    bv = jax.random.normal(ks[5], (1, 1), jnp.float32) * 0.1
    return w1, b1, wp, bp, wv, bv


if __name__ == "__main__":
    key = jax.random.PRNGKey(0)
    k_state, k_state2, k_params = jax.random.split(key, 3)

    state_dim, action_dim = 16, 8          # hidden is fixed at 128 by the module

    params = init_params(k_params, state_dim, action_dim)
    packed, A = prepare_params(*params)    # one-time packing (hoisted)

    fwd = functools.partial(
        a3c_forward, w1=packed["w1"], b1=packed["b1"],
        w_heads=packed["w_heads"], b_heads=packed["b_heads"], action_dim=A)

    # ---- Plain-JAX references. ----
    w1, b1, wp, bp, wv, bv = params
    dot_hi = functools.partial(jnp.dot, precision=jax.lax.Precision.HIGHEST)
    q = lambda a: a.astype(jnp.bfloat16).astype(jnp.float32)

    def reference(state):
        # Mirrors the kernel numerics: bf16 state/shared weight, f32 heads,
        # bf16-rounded output.
        x = jnp.maximum(dot_hi(q(state), q(w1)) + b1, 0.0)
        return q(dot_hi(x, wp) + bp), q(dot_hi(x, wv) + bv)

    def reference_f32(state):
        x = jnp.maximum(dot_hi(state, w1) + b1, 0.0)
        return dot_hi(x, wp) + bp, dot_hi(x, wv) + bv

    # ---- 1) Tiny rollout batch through the Pallas path (forced). ----
    B = 8
    state = jax.random.normal(k_state, (B, state_dim), jnp.float32)
    logits, value = fwd(state, min_pallas_batch=0)
    jax.block_until_ready((logits, value))
    assert logits.shape == (B, action_dim) and value.shape == (B, 1)
    lg_ref, vl_ref = reference(state)
    assert jnp.allclose(logits, lg_ref, atol=2e-2, rtol=2e-2)
    assert jnp.allclose(value, vl_ref, atol=2e-2, rtol=2e-2)

    # Same batch via the small-batch XLA short-circuit (default threshold).
    logits_sc, value_sc = fwd(state)
    jax.block_until_ready((logits_sc, value_sc))
    assert jnp.allclose(logits_sc, logits, atol=2e-2, rtol=2e-2)
    assert jnp.allclose(value_sc, value, atol=2e-2, rtol=2e-2)

    # ---- 2) Larger batch: 2-step "parallel" grid (both TCs on v7x). ----
    B2 = 160
    state2 = jax.random.normal(k_state2, (B2, state_dim), jnp.float32)
    logits2, value2 = fwd(state2)
    jax.block_until_ready((logits2, value2))
    assert logits2.shape == (B2, action_dim) and value2.shape == (B2, 1)
    lg2_ref, vl2_ref = reference(state2)
    assert jnp.allclose(logits2, lg2_ref, atol=2e-2, rtol=2e-2)
    assert jnp.allclose(value2, vl2_ref, atol=2e-2, rtol=2e-2)

    # Sanity vs. the pure-f32 torch-equivalent forward (looser: bf16 in/out).
    lg2_f32, vl2_f32 = reference_f32(state2)
    assert jnp.allclose(logits2, lg2_f32, atol=1e-1, rtol=1e-1)
    assert jnp.allclose(value2, vl2_f32, atol=1e-1, rtol=1e-1)

    print("KERNEL_OK")
</pallas_src>

<mosaic_0001>
module attributes {stable_mosaic.version = 11 : i64} {
  func.func @a3c_kernel(%arg0: i32, %arg1: memref<16x16xbf16, #tpu.memory_space<vmem>>, %arg2: memref<16x128xbf16, #tpu.memory_space<vmem>>, %arg3: memref<1x128xf32, #tpu.memory_space<vmem>>, %arg4: memref<128x128xf32, #tpu.memory_space<vmem>>, %arg5: memref<1x128xf32, #tpu.memory_space<vmem>>, %arg6: memref<16x128xbf16, #tpu.memory_space<vmem>>) attributes {dimension_semantics = [#tpu.dimension_semantics<parallel>], iteration_bounds = array<i64: 1>, scalar_prefetch = 0 : i64, scratch_operands = 0 : i64, tpu.core_type = #tpu.core_type<tc>, window_params = [{transform_indices = @transform_0, window_bounds = array<i64: 16, 16>}, {pipeline_mode = #tpu.pipeline_mode<synchronous>, transform_indices = @transform_1, window_bounds = array<i64: 16, 128>}, {pipeline_mode = #tpu.pipeline_mode<synchronous>, transform_indices = @transform_2, window_bounds = array<i64: 1, 128>}, {pipeline_mode = #tpu.pipeline_mode<synchronous>, transform_indices = @transform_3, window_bounds = array<i64: 128, 128>}, {pipeline_mode = #tpu.pipeline_mode<synchronous>, transform_indices = @transform_4, window_bounds = array<i64: 1, 128>}, {transform_indices = @transform_5, window_bounds = array<i64: 16, 128>}]} {
    %c0 = arith.constant 0 : index
    %c0_0 = arith.constant 0 : index
    %0 = vector.load %arg1[%c0, %c0_0] : memref<16x16xbf16, #tpu.memory_space<vmem>>, vector<16x16xbf16>
    %c0_1 = arith.constant 0 : index
    %c0_2 = arith.constant 0 : index
    %1 = vector.load %arg2[%c0_1, %c0_2] : memref<16x128xbf16, #tpu.memory_space<vmem>>, vector<16x128xbf16>
    %cst = arith.constant dense<0.000000e+00> : vector<16x128xf32>
    %2 = tpu.matmul %0, %1, %cst {dimension_numbers = #tpu.dot_dimension_numbers<[1], [0], [0], [1], [0, 0, 1, 1], [], []>} : vector<16x16xbf16>, vector<16x128xbf16>, vector<16x128xf32> -> vector<16x128xf32>
    %c0_3 = arith.constant 0 : index
    %c0_4 = arith.constant 0 : index
    %3 = vector.load %arg3[%c0_3, %c0_4] : memref<1x128xf32, #tpu.memory_space<vmem>>, vector<1x128xf32>
    %4 = vector.broadcast %3 : vector<1x128xf32> to vector<16x128xf32>
    %5 = arith.addf %2, %4 : vector<16x128xf32>
    %cst_5 = arith.constant 0.000000e+00 : f32
    %6 = vector.broadcast %cst_5 : f32 to vector<16x128xf32>
    %7 = arith.maximumf %5, %6 : vector<16x128xf32>
    %c0_6 = arith.constant 0 : index
    %c0_7 = arith.constant 0 : index
    %8 = vector.load %arg4[%c0_6, %c0_7] : memref<128x128xf32, #tpu.memory_space<vmem>>, vector<128x128xf32>
    %cst_8 = arith.constant dense<0.000000e+00> : vector<16x128xf32>
    %9 = tpu.matmul %7, %8, %cst_8 {dimension_numbers = #tpu.dot_dimension_numbers<[1], [0], [0], [1], [0, 0, 1, 1], [], []>} : vector<16x128xf32>, vector<128x128xf32>, vector<16x128xf32> -> vector<16x128xf32>
    %c0_9 = arith.constant 0 : index
    %c0_10 = arith.constant 0 : index
    %10 = vector.load %arg5[%c0_9, %c0_10] : memref<1x128xf32, #tpu.memory_space<vmem>>, vector<1x128xf32>
    %11 = vector.broadcast %10 : vector<1x128xf32> to vector<16x128xf32>
    %12 = arith.addf %9, %11 : vector<16x128xf32>
    %13 = arith.truncf %12 : vector<16x128xf32> to vector<16x128xbf16>
    %c0_11 = arith.constant 0 : index
    %c0_12 = arith.constant 0 : index
    %14 = vector.load %arg6[%c0_11, %c0_12] : memref<16x128xbf16, #tpu.memory_space<vmem>>, vector<16x128xbf16>
    tpu.vector_store %arg6[%c0_11, %c0_12], %13 {strides = array<i32>} : memref<16x128xbf16, #tpu.memory_space<vmem>>, vector<16x128xbf16>,
    return
  }
  func.func @transform_0(%arg0: i32) -> (i32, i32) {
    %c0_i32 = arith.constant 0 : i32
    %c0_i32_0 = arith.constant 0 : i32
    return %arg0, %c0_i32 : i32, i32
  }
  func.func @transform_1(%arg0: i32) -> (i32, i32) {
    %c0_i32 = arith.constant 0 : i32
    %c0_i32_0 = arith.constant 0 : i32
    %c0_i32_1 = arith.constant 0 : i32
    return %c0_i32, %c0_i32_0 : i32, i32
  }
  func.func @transform_2(%arg0: i32) -> (i32, i32) {
    %c0_i32 = arith.constant 0 : i32
    %c0_i32_0 = arith.constant 0 : i32
    %c0_i32_1 = arith.constant 0 : i32
    return %c0_i32, %c0_i32_0 : i32, i32
  }
  func.func @transform_3(%arg0: i32) -> (i32, i32) {
    %c0_i32 = arith.constant 0 : i32
    %c0_i32_0 = arith.constant 0 : i32
    %c0_i32_1 = arith.constant 0 : i32
    return %c0_i32, %c0_i32_0 : i32, i32
  }
  func.func @transform_4(%arg0: i32) -> (i32, i32) {
    %c0_i32 = arith.constant 0 : i32
    %c0_i32_0 = arith.constant 0 : i32
    %c0_i32_1 = arith.constant 0 : i32
    return %c0_i32, %c0_i32_0 : i32, i32
  }
  func.func @transform_5(%arg0: i32) -> (i32, i32) {
    %c0_i32 = arith.constant 0 : i32
    %c0_i32_0 = arith.constant 0 : i32
    return %arg0, %c0_i32 : i32, i32
  }
}

</mosaic_0001>

<llo_original>
// kernel: a3c_forward.1
$region0: #{a3c_forward.1}
  #allocation0 [shape = 'u32[]', space=smem, size = 0x4, offset = 0x4, fixed_abs, tag = 'smem constant byte address 0x4 - core index']
  #allocation1 [shape = 'u32[144,128]{1,0:T(1,128)}', space=vmem, size = 0x12000, scoped, tag = 'internal scratch']
  %s0 = inlined_call_operand.vmem [shape: bf16[16,16], index: 0, kind: input, shape index: {}]
  %s1 = inlined_call_operand.vmem [shape: bf16[16,128], index: 1, kind: input, shape index: {}]
  %s2 = inlined_call_operand.vmem [shape: f32[1,128], index: 2, kind: input, shape index: {}]
  %s3 = inlined_call_operand.hbm [shape: f32[128,128], index: 3, kind: input, shape index: {}]
  %s4 = inlined_call_operand.vmem [shape: f32[1,128], index: 4, kind: input, shape index: {}]
  %s5 = inlined_call_operand.vmem [shape: bf16[16,128], index: 5, kind: output, shape index: {}]
  %s6 = sld [smem:[#allocation0]]
  $region34: #{a3c_forward.1} parent=0
    _
  %s8 = ssub.s32 1, %s6
  %s9 = scalar_select 0, %s8, %s6
  $region1: #{a3c_forward.1} parent=0
    #allocation2 [shape = 'u8[65536]{0}', space=vmem, size = 0x10000, scoped, tag = 'input window, operand 3, single buffered']
    #allocation3 [shape = 's32[1]{0}', space=sflag, size = 0x4, scoped, tag = 'scoped memory for a3c_forward.1']
    %10 = vsyncpa [#allocation3], 0
    // Predicated region
    $region2: #{a3c_forward.1} parent=1 // pred_check
      _
    $region3: #{a3c_forward.1} parent=1 // pred_check_branch
      %12 = sbr.rel (0) target = $region5
    $region4: #{a3c_forward.1} parent=1 // pred_region
      _
    $region5: #{a3c_forward.1} parent=1 // pred_fallthru
      _
    // Predicated region
    $region6: #{a3c_forward.1} parent=1 // pred_check
      _
    $region7: #{a3c_forward.1} parent=1 // pred_check_branch
      %14 = sbr.rel (0) target = $region9
    $region8: #{a3c_forward.1} parent=1 // pred_region
      _
    $region9: #{a3c_forward.1} parent=1 // pred_fallthru
      _
    // Predicated region
    $region10: #{a3c_forward.1} parent=1 // pred_check
      _
    $region11: #{a3c_forward.1} parent=1 // pred_check_branch
      %16 = sbr.rel (0) target = $region13
    $region12: #{a3c_forward.1} parent=1 // pred_region
      _
    $region13: #{a3c_forward.1} parent=1 // pred_fallthru
      _
    // Predicated region
    $region14: #{a3c_forward.1} parent=1 // pred_check
      _
    $region15: #{a3c_forward.1} parent=1 // pred_check_branch
      %18 = sbr.rel (0) target = $region17
    $region16: #{a3c_forward.1} parent=1 // pred_region
      %s20 = ssub.s32 2048, 2048
      %21 = vsyncadd [#allocation3], %s20
      %s22 = sshll.u32 [#allocation2], 4
      %s23 = int_to_ptr.vmem [resolvable:$true] %s22
      %28 = dma.hbm_to_vmem [thread:$0]  %s3, 2048, %s23, [#allocation3], 128, 128, 8
    $region17: #{a3c_forward.1} parent=1 // pred_fallthru
      _
    // Predicated region
    $region18: #{a3c_forward.1} parent=1 // pred_check
      _
    $region19: #{a3c_forward.1} parent=1 // pred_check_branch
      %30 = sbr.rel (0) target = $region21
    $region20: #{a3c_forward.1} parent=1 // pred_region
      _
    $region21: #{a3c_forward.1} parent=1 // pred_fallthru
      _
    // Predicated region
    $region22: #{a3c_forward.1} parent=1 // pred_check
      _
    $region23: #{a3c_forward.1} parent=1 // pred_check_branch
      %32 = sbr.rel (0) target = $region25
    $region24: #{a3c_forward.1} parent=1 // pred_region
      %33 = dma.done [#allocation3], 2048
    $region25: #{a3c_forward.1} parent=1 // pred_fallthru
      _
    %v35 = vld [vmem:[%s0] sm:$0xf]
    %v36 = vld [vmem:[%s0 + $0x4] sm:$0xf]
    %v37 = vld [vmem:[%s1] sm:$0xf]
    %v38 = vld [vmem:[%s1 + $0x4] sm:$0xf]
    %v39 = vld [vmem:[%s2] sm:$0x1]
    %v41 = vlaneseq
    %v42 = vshrl.u32 %v41, 7
    %v43 = vsub.s32 0, %v42
    %v44 = vrot.slane %v39, %v43
    %v48 = vunpack.c.l.b16 %v35
    %v49 = vunpack.c.l.b16 %v36
    %v50 = vpack.c.b16 %v49, %v48
    %v53 = vunpack.c.l.b16 %v37
    %v54 = vunpack.c.l.b16 %v38
    %v55 = vpack.c.b16 %v54, %v53
    %vm57 = vcmask 130048
    %v59 = vsel %vm57, %v50, 0
    %61 = vmatprep.subr.bf16.mxu0 0
    %62 = vmatpush1.bf16.msra.mxu0 %v55
    %63 = vmatprep.subr.bf16.mxu0 0
    %64 = vmatpush1.bf16.msra.mxu0 0
    %65 = vmatprep.subr.bf16.mxu0 0
    %66 = vmatpush1.bf16.msra.mxu0 0
    %67 = vmatprep.subr.bf16.mxu0 0
    %68 = vmatpush1.bf16.msra.mxu0 0
    %69 = vmatprep.subr.bf16.mxu0 0
    %70 = vmatpush1.bf16.msra.mxu0 0
    %71 = vmatprep.subr.bf16.mxu0 0
    %72 = vmatpush1.bf16.msra.mxu0 0
    %73 = vmatprep.subr.bf16.mxu0 0
    %74 = vmatpush1.bf16.msra.mxu0 0
    %75 = vmatprep.subr.bf16.mxu0 0
    %76 = vmatpush1.bf16.msra.mxu0 0
    %77 = vmatprep.subr.bf16.mxu0 0
    %78 = vmatpush1.bf16.msra.mxu0 0
    %79 = vmatprep.subr.bf16.mxu0 0
    %80 = vmatpush1.bf16.msra.mxu0 0
    %81 = vmatprep.subr.bf16.mxu0 0
    %82 = vmatpush1.bf16.msra.mxu0 0
    %83 = vmatprep.subr.bf16.mxu0 0
    %84 = vmatpush1.bf16.msra.mxu0 0
    %85 = vmatprep.subr.bf16.mxu0 0
    %86 = vmatpush1.bf16.msra.mxu0 0
    %87 = vmatprep.subr.bf16.mxu0 0
    %88 = vmatpush1.bf16.msra.mxu0 0
    %89 = vmatprep.subr.bf16.mxu0 0
    %90 = vmatpush1.bf16.msra.mxu0 0
    %91 = vmatprep.subr.bf16.mxu0 0
    %92 = vmatpush1.bf16.msra.mxu0 0
    %93 = vmatprep.mubr.bf16.mxu0 0
    %94 = vmatmul.mubr.bf16.gmra.mrb[0].mxu0 %v59
    %v95 = vpop.f32.mrb[0].mxu0
    %v96 = vadd.f32 %v44, %v95
    %v97 = vpop.f32.mrb[0].mxu0
    %v98 = vpop.f32.mrb[0].mxu0
    %v99 = vadd.f32 %v44, %v98
    %v100 = vpop.f32.mrb[0].mxu0
    %101 = vdwg.mxu0
    %v102 = vmax.f32 %v96, 0.0
    %v103 = vmax.f32 %v99, 0.0
    %v104 = vld [vmem:[#allocation2] sm:$0xff]
    %v105 = vld [vmem:[#allocation2 + $0x8] sm:$0xff]
    %v106 = vld [vmem:[#allocation2 + $0x10] sm:$0xff]
    %v107 = vld [vmem:[#allocation2 + $0x18] sm:$0xff]
    %v108 = vld [vmem:[#allocation2 + $0x20] sm:$0xff]
    %v109 = vld [vmem:[#allocation2 + $0x28] sm:$0xff]
    %v110 = vld [vmem:[#allocation2 + $0x30] sm:$0xff]
    %v111 = vld [vmem:[#allocation2 + $0x38] sm:$0xff]
    %v112 = vld [vmem:[#allocation2 + $0x40] sm:$0xff]
    %v113 = vld [vmem:[#allocation2 + $0x48] sm:$0xff]
    %v114 = vld [vmem:[#allocation2 + $0x50] sm:$0xff]
    %v115 = vld [vmem:[#allocation2 + $0x58] sm:$0xff]
    %v116 = vld [vmem:[#allocation2 + $0x60] sm:$0xff]
    %v117 = vld [vmem:[#allocation2 + $0x68] sm:$0xff]
    %v118 = vld [vmem:[#allocation2 + $0x70] sm:$0xff]
    %v119 = vld [vmem:[#allocation2 + $0x78] sm:$0xff]
    %v120 = vld [vmem:[%s4] sm:$0x1]
    %v122 = vlaneseq
    %v123 = vshrl.u32 %v122, 7
    %v124 = vsub.s32 0, %v123
    %v125 = vrot.slane %v120, %v124
    %127 = vmatprep.subr.mxu0 0.0
    %128 = vmatpush1.msra.mxu0 %v104
    %129 = vmatprep.subr.mxu0 0.0
    %130 = vmatpush1.msra.mxu0 %v105
    %131 = vmatprep.subr.mxu0 0.0
    %132 = vmatpush1.msra.mxu0 %v106
    %133 = vmatprep.subr.mxu0 0.0
    %134 = vmatpush1.msra.mxu0 %v107
    %135 = vmatprep.subr.mxu0 0.0
    %136 = vmatpush1.msra.mxu0 %v108
    %137 = vmatprep.subr.mxu0 0.0
    %138 = vmatpush1.msra.mxu0 %v109
    %139 = vmatprep.subr.mxu0 0.0
    %140 = vmatpush1.msra.mxu0 %v110
    %141 = vmatprep.subr.mxu0 0.0
    %142 = vmatpush1.msra.mxu0 %v111
    %143 = vmatprep.subr.mxu0 0.0
    %144 = vmatpush1.msra.mxu0 %v112
    %145 = vmatprep.subr.mxu0 0.0
    %146 = vmatpush1.msra.mxu0 %v113
    %147 = vmatprep.subr.mxu0 0.0
    %148 = vmatpush1.msra.mxu0 %v114
    %149 = vmatprep.subr.mxu0 0.0
    %150 = vmatpush1.msra.mxu0 %v115
    %151 = vmatprep.subr.mxu0 0.0
    %152 = vmatpush1.msra.mxu0 %v116
    %153 = vmatprep.subr.mxu0 0.0
    %154 = vmatpush1.msra.mxu0 %v117
    %155 = vmatprep.subr.mxu0 0.0
    %156 = vmatpush1.msra.mxu0 %v118
    %157 = vmatprep.subr.mxu0 0.0
    %158 = vmatpush1.msra.mxu0 %v119
    %159 = vmatprep.subr.mxu0 0.0
    %160 = vmatpush1.msra.mxu0 0.0
    %161 = vmatprep.subr.mxu0 0.0
    %162 = vmatpush1.msra.mxu0 0.0
    %163 = vmatprep.subr.mxu0 0.0
    %164 = vmatpush1.msra.mxu0 0.0
    %165 = vmatprep.subr.mxu0 0.0
    %166 = vmatpush1.msra.mxu0 0.0
    %167 = vmatprep.subr.mxu0 0.0
    %168 = vmatpush1.msra.mxu0 0.0
    %169 = vmatprep.subr.mxu0 0.0
    %170 = vmatpush1.msra.mxu0 0.0
    %171 = vmatprep.subr.mxu0 0.0
    %172 = vmatpush1.msra.mxu0 0.0
    %173 = vmatprep.subr.mxu0 0.0
    %174 = vmatpush1.msra.mxu0 0.0
    %175 = vmatprep.subr.mxu0 0.0
    %176 = vmatpush1.msra.mxu0 0.0
    %177 = vmatprep.subr.mxu0 0.0
    %178 = vmatpush1.msra.mxu0 0.0
    %179 = vmatprep.subr.mxu0 0.0
    %180 = vmatpush1.msra.mxu0 0.0
    %181 = vmatprep.subr.mxu0 0.0
    %182 = vmatpush1.msra.mxu0 0.0
    %183 = vmatprep.subr.mxu0 0.0
    %184 = vmatpush1.msra.mxu0 0.0
    %185 = vmatprep.subr.mxu0 0.0
    %186 = vmatpush1.msra.mxu0 0.0
    %187 = vmatprep.subr.mxu0 0.0
    %188 = vmatpush1.msra.mxu0 0.0
    %189 = vmatprep.subr.mxu0 0.0
    %190 = vmatpush1.msra.mxu0 0.0
    %191 = vmatprep.mubr.f32.mxu0 0.0
    %192 = vmatmul.mubr.f32.gmra.mrb[0].mxu0 %v102
    %v193 = vpop.f32.mrb[0].mxu0
    %v194 = vadd.f32 %v125, %v193
    %v195 = vpop.f32.mrb[0].mxu0
    %196 = vmatprep.mubr.f32.mxu0 0.0
    %197 = vmatmul.mubr.f32.gmra.mrb[0].mxu0 %v103
    %v198 = vpop.f32.mrb[0].mxu0
    %v199 = vadd.f32 %v125, %v198
    %v200 = vpop.f32.mrb[0].mxu0
    %201 = vdwg.mxu0
    %v202 = vpack.c.bf16 %v199, %v194
    %v204 = vunpack.c.l.b16 %v202
    %v205 = vunpack.c.h.b16 %v202
    %v206 = vpack.c.b16 %v204, %v204
    %v207 = vpack.c.b16 %v205, %v205
    %210 = vst [vmem:[%s5] sm:$0xf] %v206
    %211 = vst [vmem:[%s5 + $0x4] sm:$0xf] %v207
    // Predicated region
    $region26: #{a3c_forward.1} parent=1 // pred_check
      _
    $region27: #{a3c_forward.1} parent=1 // pred_check_branch
      %213 = sbr.rel (0) target = $region29
    $region28: #{a3c_forward.1} parent=1 // pred_region
      _
    $region29: #{a3c_forward.1} parent=1 // pred_fallthru
      _
    // Predicated region
    $region30: #{a3c_forward.1} parent=1 // pred_check
      _
    $region31: #{a3c_forward.1} parent=1 // pred_check_branch
      %215 = sbr.rel (0) target = $region33
    $region32: #{a3c_forward.1} parent=1 // pred_region
      _
    $region33: #{a3c_forward.1} parent=1 // pred_fallthru
      _
    %216 = vsyncpa [#allocation3], 1

</llo_original>
